<compile_context>
chip_gen: v7x
topology: tpu7x:2x2x1
jax: 0.10.0
libtpu: 0.0.40
codegen_flags: <defaults>
</compile_context>

<pallas_src>
import jax
import jax.numpy as jnp
import numpy as np
from jax.experimental import pallas as pl
from jax.experimental.pallas import tpu as pltpu


# ----------------------------------------------------------------------------
# Fused Pallas kernel (all layers unrolled at trace time)
# ----------------------------------------------------------------------------
def make_tcn_kernel(layer_meta, has_top_ds, neg_slope=0.01):
    """layer_meta: list of {"dil": int, "has_ds": bool} per TemporalBlock."""

    def kernel(*refs):
        it = iter(refs)
        x_ref = next(it)                       # (C0, N)   N = B*L
        layers = []
        for m in layer_meta:
            bns = next(it)                     # (c_in, 1)  folded BN scale
            bnb = next(it)                     # (c_in, 1)  folded BN shift
            w = next(it)                       # (c_out, 3*c_in) packed taps
            b = next(it)                       # (c_out, 1) conv bias
            ml = next(it)                      # (1, N) mask for tap t-dil
            mr = next(it)                      # (1, N) mask for tap t+dil
            dw = next(it) if m["has_ds"] else None   # (c_out, c_in)
            db = next(it) if m["has_ds"] else None   # (c_out, 1)
            layers.append((m, bns, bnb, w, b, ml, mr, dw, db))
        tdw = next(it) if has_top_ds else None       # (C_final, C0)
        tdb = next(it) if has_top_ds else None       # (C_final, 1)
        out_ref = next(it)                           # (C_final, N)

        x0 = x_ref[...]                              # (C0, N) f32, read once
        N = x0.shape[1]

        h = x0
        for (m, bns, bnb, w, b, ml, mr, dw, db) in layers:
            dil = m["dil"]
            # BatchNorm1d (eval) folded to per-channel affine.
            y = h * bns[...] + bnb[...]
            # LeakyReLU(0.01) -- single VALU max.
            y = jnp.maximum(y, neg_slope * y)

            # Centered dilated "same" conv: all 3 taps in one MXU matmul.
            #   left  tap: y[:, t-dil]  (zero where t-dil < 0 within a batch)
            #   right tap: y[:, t+dil]  (zero where t+dil >= L within a batch)
            # pltpu.roll follows jnp.roll semantics: result[t] = y[t - shift].
            left = pltpu.roll(y, shift=dil % N, axis=1) * ml[...]
            right = pltpu.roll(y, shift=(-dil) % N, axis=1) * mr[...]
            stacked = jnp.concatenate([left, y, right], axis=0)  # (3*c_in, N)
            out = jnp.dot(w[...], stacked,
                          preferred_element_type=jnp.float32) + b[...]

            # Block residual (on the raw block input h).
            if m["has_ds"]:
                res = jnp.dot(dw[...], h,
                              preferred_element_type=jnp.float32) + db[...]
            else:
                res = h
            h = out + res

        # Top-level TemporalConvNet residual (on the original input).
        if has_top_ds:
            top = jnp.dot(tdw[...], x0,
                          preferred_element_type=jnp.float32) + tdb[...]
        else:
            top = x0

        out_ref[...] = (h + top).astype(out_ref.dtype)

    return kernel


def temporal_conv_net(x, params, top_ds):
    """Fused TCN forward.  x: (B, C0, L) f32 -> (B, C_final, L) f32."""
    B, c0, L = x.shape
    N = B * L

    # Fold batch into the lane axis: (B, C, L) -> (C, B*L).
    x2d = jnp.transpose(x, (1, 0, 2)).reshape(c0, N)

    # Per-batch position along the folded lane axis (compile-time-sized).
    pos = jnp.tile(jnp.arange(L, dtype=jnp.int32), B)         # (N,)

    def shift_mask(s):
        ok = (pos + s >= 0) & (pos + s < L)
        return ok.astype(jnp.float32)[None, :]                # (1, N)

    args = [x2d]
    layer_meta = []
    for p in params:
        _, c_out, c_in = p["w3"].shape
        # Pack (3, c_out, c_in) -> lane-contiguous (c_out, 3*c_in),
        # tap order [t-dil, t, t+dil] matching the stacked RHS in the kernel.
        wp = jnp.transpose(p["w3"], (1, 0, 2)).reshape(c_out, 3 * c_in)
        dil = int(p["dil"])
        args += [p["bn_scale"], p["bn_shift"], wp, p["b"],
                 shift_mask(-dil), shift_mask(dil)]
        has_ds = "dw" in p
        if has_ds:
            args += [p["dw"], p["db"]]
        layer_meta.append({"dil": dil, "has_ds": has_ds})

    has_top = top_ds is not None
    if has_top:
        args += [top_ds["dw"], top_ds["db"]]

    c_final = params[-1]["w3"].shape[1]

    # Empty grid: every array is one full-extent VMEM block (tiny model, so
    # everything comfortably fits); output last dim N = B*L is a multiple of
    # 128 -> unmasked lane-dense stores.
    out2d = pl.pallas_call(
        make_tcn_kernel(layer_meta, has_top),
        out_shape=jax.ShapeDtypeStruct((c_final, N), jnp.float32),
    )(*args)

    # (C_final, B*L) -> (B, C_final, L)
    return jnp.transpose(out2d.reshape(c_final, B, L), (1, 0, 2))


# ----------------------------------------------------------------------------
# Parameter init (BatchNorm running stats folded to scale/shift)
# ----------------------------------------------------------------------------
def init_tcn_params(key, layer_count, channel_list):
    assert len(channel_list) == 3
    eps = 1e-5
    params = []
    for i in range(layer_count):
        dil = 2 ** i
        c_in = channel_list[0] if i == 0 else channel_list[1]
        c_out = channel_list[2] if i == layer_count - 1 else channel_list[1]
        ks = jax.random.split(jax.random.fold_in(key, i), 8)
        gamma = 1.0 + 0.1 * jax.random.normal(ks[0], (c_in,), jnp.float32)
        beta = 0.1 * jax.random.normal(ks[1], (c_in,), jnp.float32)
        rmean = 0.1 * jax.random.normal(ks[2], (c_in,), jnp.float32)
        rvar = 1.0 + 0.1 * jax.random.uniform(ks[3], (c_in,), jnp.float32)
        scale = gamma / jnp.sqrt(rvar + eps)
        shift = beta - rmean * scale
        w3 = 0.1 * jax.random.normal(ks[4], (3, c_out, c_in), jnp.float32)
        b = 0.1 * jax.random.normal(ks[5], (c_out,), jnp.float32)
        p = {"bn_scale": scale[:, None], "bn_shift": shift[:, None],
             "w3": w3, "b": b[:, None], "dil": dil}
        if c_in != c_out:
            p["dw"] = 0.1 * jax.random.normal(ks[6], (c_out, c_in), jnp.float32)
            p["db"] = (0.1 * jax.random.normal(ks[7], (c_out,),
                                               jnp.float32))[:, None]
        params.append(p)

    top_ds = None
    if channel_list[0] != channel_list[2]:
        k1, k2 = jax.random.split(jax.random.fold_in(key, 10_000))
        top_ds = {
            "dw": 0.1 * jax.random.normal(
                k1, (channel_list[2], channel_list[0]), jnp.float32),
            "db": (0.1 * jax.random.normal(
                k2, (channel_list[2],), jnp.float32))[:, None],
        }
    return params, top_ds


# ----------------------------------------------------------------------------
# Pure-JAX reference (correctness check)
# ----------------------------------------------------------------------------
def _ref_block(xb, p):
    dil = p["dil"]
    y = xb * p["bn_scale"][None] + p["bn_shift"][None]
    y = jnp.where(y >= 0, y, 0.01 * y)
    B, c_in, L = xb.shape
    c_out = p["w3"].shape[1]
    yp = jnp.pad(y, ((0, 0), (0, 0), (dil, dil)))
    out = jnp.zeros((B, c_out, L), jnp.float32)
    for k in range(3):
        xs = yp[:, :, k * dil:k * dil + L]
        out = out + jnp.einsum("oi,bil->bol", p["w3"][k], xs)
    out = out + p["b"][None]
    if "dw" in p:
        res = jnp.einsum("oi,bil->bol", p["dw"], xb) + p["db"][None]
    else:
        res = xb
    return out + res


def _ref_forward(x, params, top_ds):
    out = x
    for p in params:
        out = _ref_block(out, p)
    if top_ds is None:
        res = x
    else:
        res = jnp.einsum("oi,bil->bol", top_ds["dw"], x) + top_ds["db"][None]
    return out + res


# ----------------------------------------------------------------------------
if __name__ == "__main__":
    key = jax.random.PRNGKey(0)
    B, L = 2, 128
    configs = [
        (2, [8, 16, 8]),    # per-block downsamples, no top-level downsample
        (2, [8, 16, 16]),   # block-0 downsample + top-level downsample
    ]
    for cfg_id, (layer_count, channel_list) in enumerate(configs):
        kx, kp = jax.random.split(jax.random.fold_in(key, cfg_id))
        x = jax.random.normal(kx, (B, channel_list[0], L), jnp.float32)
        params, top_ds = init_tcn_params(kp, layer_count, channel_list)

        out = jax.block_until_ready(temporal_conv_net(x, params, top_ds))
        ref = _ref_forward(x, params, top_ds)
        np.testing.assert_allclose(np.asarray(out), np.asarray(ref),
                                   rtol=2e-2, atol=2e-2)
        assert out.shape == (B, channel_list[2], L)

    print("KERNEL_OK")
</pallas_src>

<mosaic_0001>
module attributes {stable_mosaic.version = 11 : i64} {
  func.func @kernel(%arg0: memref<8x256xf32, #tpu.memory_space<vmem>>, %arg1: memref<8x1xf32, #tpu.memory_space<vmem>>, %arg2: memref<8x1xf32, #tpu.memory_space<vmem>>, %arg3: memref<16x24xf32, #tpu.memory_space<vmem>>, %arg4: memref<16x1xf32, #tpu.memory_space<vmem>>, %arg5: memref<1x256xf32, #tpu.memory_space<vmem>>, %arg6: memref<1x256xf32, #tpu.memory_space<vmem>>, %arg7: memref<16x8xf32, #tpu.memory_space<vmem>>, %arg8: memref<16x1xf32, #tpu.memory_space<vmem>>, %arg9: memref<16x1xf32, #tpu.memory_space<vmem>>, %arg10: memref<16x1xf32, #tpu.memory_space<vmem>>, %arg11: memref<8x48xf32, #tpu.memory_space<vmem>>, %arg12: memref<8x1xf32, #tpu.memory_space<vmem>>, %arg13: memref<1x256xf32, #tpu.memory_space<vmem>>, %arg14: memref<1x256xf32, #tpu.memory_space<vmem>>, %arg15: memref<8x16xf32, #tpu.memory_space<vmem>>, %arg16: memref<8x1xf32, #tpu.memory_space<vmem>>, %arg17: memref<8x256xf32, #tpu.memory_space<vmem>>) attributes {dimension_semantics = [], scalar_prefetch = 0 : i64, scratch_operands = 0 : i64, tpu.core_type = #tpu.core_type<tc>} {
    %c0 = arith.constant 0 : index
    %c0_0 = arith.constant 0 : index
    %0 = vector.load %arg0[%c0, %c0_0] : memref<8x256xf32, #tpu.memory_space<vmem>>, vector<8x256xf32>
    %c0_1 = arith.constant 0 : index
    %c0_2 = arith.constant 0 : index
    %1 = vector.load %arg1[%c0_1, %c0_2] : memref<8x1xf32, #tpu.memory_space<vmem>>, vector<8x1xf32>
    %2 = vector.broadcast %1 : vector<8x1xf32> to vector<8x256xf32>
    %3 = arith.mulf %0, %2 : vector<8x256xf32>
    %c0_3 = arith.constant 0 : index
    %c0_4 = arith.constant 0 : index
    %4 = vector.load %arg2[%c0_3, %c0_4] : memref<8x1xf32, #tpu.memory_space<vmem>>, vector<8x1xf32>
    %5 = vector.broadcast %4 : vector<8x1xf32> to vector<8x256xf32>
    %6 = arith.addf %3, %5 : vector<8x256xf32>
    %cst = arith.constant 0.00999999977 : f32
    %7 = vector.broadcast %cst : f32 to vector<8x256xf32>
    %8 = arith.mulf %7, %6 : vector<8x256xf32>
    %9 = arith.maximumf %6, %8 : vector<8x256xf32>
    %c1_i32 = arith.constant 1 : i32
    %10 = tpu.dynamic_rotate %9 by %c1_i32 dim 1 : vector<8x256xf32>, i32 -> vector<8x256xf32>
    %c0_5 = arith.constant 0 : index
    %c0_6 = arith.constant 0 : index
    %11 = vector.load %arg5[%c0_5, %c0_6] : memref<1x256xf32, #tpu.memory_space<vmem>>, vector<1x256xf32>
    %12 = vector.broadcast %11 : vector<1x256xf32> to vector<8x256xf32>
    %13 = arith.mulf %10, %12 : vector<8x256xf32>
    %c255_i32 = arith.constant 255 : i32
    %14 = tpu.dynamic_rotate %9 by %c255_i32 dim 1 : vector<8x256xf32>, i32 -> vector<8x256xf32>
    %c0_7 = arith.constant 0 : index
    %c0_8 = arith.constant 0 : index
    %15 = vector.load %arg6[%c0_7, %c0_8] : memref<1x256xf32, #tpu.memory_space<vmem>>, vector<1x256xf32>
    %16 = vector.broadcast %15 : vector<1x256xf32> to vector<8x256xf32>
    %17 = arith.mulf %14, %16 : vector<8x256xf32>
    %18 = tpu.concatenate %13, %9, %17 in 0 : vector<8x256xf32>, vector<8x256xf32>, vector<8x256xf32> -> vector<24x256xf32>
    %c0_9 = arith.constant 0 : index
    %c0_10 = arith.constant 0 : index
    %19 = vector.load %arg3[%c0_9, %c0_10] : memref<16x24xf32, #tpu.memory_space<vmem>>, vector<16x24xf32>
    %cst_11 = arith.constant dense<0.000000e+00> : vector<16x256xf32>
    %20 = tpu.matmul %19, %18, %cst_11 {dimension_numbers = #tpu.dot_dimension_numbers<[1], [0], [0], [1], [0, 0, 1, 1], [], []>} : vector<16x24xf32>, vector<24x256xf32>, vector<16x256xf32> -> vector<16x256xf32>
    %c0_12 = arith.constant 0 : index
    %c0_13 = arith.constant 0 : index
    %21 = vector.load %arg4[%c0_12, %c0_13] : memref<16x1xf32, #tpu.memory_space<vmem>>, vector<16x1xf32>
    %22 = vector.broadcast %21 : vector<16x1xf32> to vector<16x256xf32>
    %23 = arith.addf %20, %22 : vector<16x256xf32>
    %c0_14 = arith.constant 0 : index
    %c0_15 = arith.constant 0 : index
    %24 = vector.load %arg7[%c0_14, %c0_15] : memref<16x8xf32, #tpu.memory_space<vmem>>, vector<16x8xf32>
    %cst_16 = arith.constant dense<0.000000e+00> : vector<16x256xf32>
    %25 = tpu.matmul %24, %0, %cst_16 {dimension_numbers = #tpu.dot_dimension_numbers<[1], [0], [0], [1], [0, 0, 1, 1], [], []>} : vector<16x8xf32>, vector<8x256xf32>, vector<16x256xf32> -> vector<16x256xf32>
    %c0_17 = arith.constant 0 : index
    %c0_18 = arith.constant 0 : index
    %26 = vector.load %arg8[%c0_17, %c0_18] : memref<16x1xf32, #tpu.memory_space<vmem>>, vector<16x1xf32>
    %27 = vector.broadcast %26 : vector<16x1xf32> to vector<16x256xf32>
    %28 = arith.addf %25, %27 : vector<16x256xf32>
    %29 = arith.addf %23, %28 : vector<16x256xf32>
    %c0_19 = arith.constant 0 : index
    %c0_20 = arith.constant 0 : index
    %30 = vector.load %arg9[%c0_19, %c0_20] : memref<16x1xf32, #tpu.memory_space<vmem>>, vector<16x1xf32>
    %31 = vector.broadcast %30 : vector<16x1xf32> to vector<16x256xf32>
    %32 = arith.mulf %29, %31 : vector<16x256xf32>
    %c0_21 = arith.constant 0 : index
    %c0_22 = arith.constant 0 : index
    %33 = vector.load %arg10[%c0_21, %c0_22] : memref<16x1xf32, #tpu.memory_space<vmem>>, vector<16x1xf32>
    %34 = vector.broadcast %33 : vector<16x1xf32> to vector<16x256xf32>
    %35 = arith.addf %32, %34 : vector<16x256xf32>
    %cst_23 = arith.constant 0.00999999977 : f32
    %36 = vector.broadcast %cst_23 : f32 to vector<16x256xf32>
    %37 = arith.mulf %36, %35 : vector<16x256xf32>
    %38 = arith.maximumf %35, %37 : vector<16x256xf32>
    %c2_i32 = arith.constant 2 : i32
    %39 = tpu.dynamic_rotate %38 by %c2_i32 dim 1 : vector<16x256xf32>, i32 -> vector<16x256xf32>
    %c0_24 = arith.constant 0 : index
    %c0_25 = arith.constant 0 : index
    %40 = vector.load %arg13[%c0_24, %c0_25] : memref<1x256xf32, #tpu.memory_space<vmem>>, vector<1x256xf32>
    %41 = vector.broadcast %40 : vector<1x256xf32> to vector<16x256xf32>
    %42 = arith.mulf %39, %41 : vector<16x256xf32>
    %c254_i32 = arith.constant 254 : i32
    %43 = tpu.dynamic_rotate %38 by %c254_i32 dim 1 : vector<16x256xf32>, i32 -> vector<16x256xf32>
    %c0_26 = arith.constant 0 : index
    %c0_27 = arith.constant 0 : index
    %44 = vector.load %arg14[%c0_26, %c0_27] : memref<1x256xf32, #tpu.memory_space<vmem>>, vector<1x256xf32>
    %45 = vector.broadcast %44 : vector<1x256xf32> to vector<16x256xf32>
    %46 = arith.mulf %43, %45 : vector<16x256xf32>
    %47 = tpu.concatenate %42, %38, %46 in 0 : vector<16x256xf32>, vector<16x256xf32>, vector<16x256xf32> -> vector<48x256xf32>
    %c0_28 = arith.constant 0 : index
    %c0_29 = arith.constant 0 : index
    %48 = vector.load %arg11[%c0_28, %c0_29] : memref<8x48xf32, #tpu.memory_space<vmem>>, vector<8x48xf32>
    %cst_30 = arith.constant dense<0.000000e+00> : vector<8x256xf32>
    %49 = tpu.matmul %48, %47, %cst_30 {dimension_numbers = #tpu.dot_dimension_numbers<[1], [0], [0], [1], [0, 0, 1, 1], [], []>} : vector<8x48xf32>, vector<48x256xf32>, vector<8x256xf32> -> vector<8x256xf32>
    %c0_31 = arith.constant 0 : index
    %c0_32 = arith.constant 0 : index
    %50 = vector.load %arg12[%c0_31, %c0_32] : memref<8x1xf32, #tpu.memory_space<vmem>>, vector<8x1xf32>
    %51 = vector.broadcast %50 : vector<8x1xf32> to vector<8x256xf32>
    %52 = arith.addf %49, %51 : vector<8x256xf32>
    %c0_33 = arith.constant 0 : index
    %c0_34 = arith.constant 0 : index
    %53 = vector.load %arg15[%c0_33, %c0_34] : memref<8x16xf32, #tpu.memory_space<vmem>>, vector<8x16xf32>
    %cst_35 = arith.constant dense<0.000000e+00> : vector<8x256xf32>
    %54 = tpu.matmul %53, %29, %cst_35 {dimension_numbers = #tpu.dot_dimension_numbers<[1], [0], [0], [1], [0, 0, 1, 1], [], []>} : vector<8x16xf32>, vector<16x256xf32>, vector<8x256xf32> -> vector<8x256xf32>
    %c0_36 = arith.constant 0 : index
    %c0_37 = arith.constant 0 : index
    %55 = vector.load %arg16[%c0_36, %c0_37] : memref<8x1xf32, #tpu.memory_space<vmem>>, vector<8x1xf32>
    %56 = vector.broadcast %55 : vector<8x1xf32> to vector<8x256xf32>
    %57 = arith.addf %54, %56 : vector<8x256xf32>
    %58 = arith.addf %52, %57 : vector<8x256xf32>
    %59 = arith.addf %58, %0 : vector<8x256xf32>
    %c0_38 = arith.constant 0 : index
    %c0_39 = arith.constant 0 : index
    %60 = vector.load %arg17[%c0_38, %c0_39] : memref<8x256xf32, #tpu.memory_space<vmem>>, vector<8x256xf32>
    tpu.vector_store %arg17[%c0_38, %c0_39], %59 {strides = array<i32>} : memref<8x256xf32, #tpu.memory_space<vmem>>, vector<8x256xf32>,
    return
  }
}

</mosaic_0001>

<llo_original>
// kernel: tpu_custom_call.1
$region0: #{tpu_custom_call.1}
  #allocation0 [shape = 'u32[]', space=smem, size = 0x4, offset = 0x4, fixed_abs, tag = 'smem constant byte address 0x4 - core index']
  #allocation1 [shape = 'u32[144,128]{1,0:T(1,128)}', space=vmem, size = 0x12000, scoped, tag = 'internal scratch']
  %s0 = inlined_call_operand.vmem [shape: f32[8,256], index: 0, kind: input, shape index: {}]
  %s1 = inlined_call_operand.vmem [shape: f32[8,1], index: 1, kind: input, shape index: {}]
  %s2 = inlined_call_operand.vmem [shape: f32[8,1], index: 2, kind: input, shape index: {}]
  %s3 = inlined_call_operand.vmem [shape: f32[16,24], index: 3, kind: input, shape index: {}]
  %s4 = inlined_call_operand.vmem [shape: f32[16,1], index: 4, kind: input, shape index: {}]
  %s5 = inlined_call_operand.vmem [shape: f32[1,256], index: 5, kind: input, shape index: {}]
  %s6 = inlined_call_operand.vmem [shape: f32[1,256], index: 6, kind: input, shape index: {}]
  %s7 = inlined_call_operand.vmem [shape: f32[16,8], index: 7, kind: input, shape index: {}]
  %s8 = inlined_call_operand.vmem [shape: f32[16,1], index: 8, kind: input, shape index: {}]
  %s9 = inlined_call_operand.vmem [shape: f32[16,1], index: 9, kind: input, shape index: {}]
  %s10 = inlined_call_operand.vmem [shape: f32[16,1], index: 10, kind: input, shape index: {}]
  %s11 = inlined_call_operand.vmem [shape: f32[8,48], index: 11, kind: input, shape index: {}]
  %s12 = inlined_call_operand.vmem [shape: f32[8,1], index: 12, kind: input, shape index: {}]
  %s13 = inlined_call_operand.vmem [shape: f32[1,256], index: 13, kind: input, shape index: {}]
  %s14 = inlined_call_operand.vmem [shape: f32[1,256], index: 14, kind: input, shape index: {}]
  %s15 = inlined_call_operand.vmem [shape: f32[8,16], index: 15, kind: input, shape index: {}]
  %s16 = inlined_call_operand.vmem [shape: f32[8,1], index: 16, kind: input, shape index: {}]
  %s17 = inlined_call_operand.hbm [shape: f32[8,256], index: 17, kind: output, shape index: {}]
  %s18 = sld [smem:[#allocation0]]
  $region78: #{tpu_custom_call.1} parent=0
    _
  %s20 = ssub.s32 1, %s18
  %s21 = scalar_select 0, %s20, %s18
  $region1: #{tpu_custom_call.1} parent=0
    #allocation2 [shape = 'u8[8192]{0}', space=vmem, size = 0x2000, scoped, tag = 'output window, operand 0, single buffered']
    #allocation3 [shape = 's32[1]{0}', space=sflag, size = 0x4, scoped, tag = 'scoped memory for tpu_custom_call.1']
    %22 = vsyncpa [#allocation3], 0
    // Predicated region
    $region2: #{tpu_custom_call.1} parent=1 // pred_check
      _
    $region3: #{tpu_custom_call.1} parent=1 // pred_check_branch
      %24 = sbr.rel (0) target = $region5
    $region4: #{tpu_custom_call.1} parent=1 // pred_region
      _
    $region5: #{tpu_custom_call.1} parent=1 // pred_fallthru
      _
    // Predicated region
    $region6: #{tpu_custom_call.1} parent=1 // pred_check
      _
    $region7: #{tpu_custom_call.1} parent=1 // pred_check_branch
      %26 = sbr.rel (0) target = $region9
    $region8: #{tpu_custom_call.1} parent=1 // pred_region
      _
    $region9: #{tpu_custom_call.1} parent=1 // pred_fallthru
      _
    // Predicated region
    $region10: #{tpu_custom_call.1} parent=1 // pred_check
      _
    $region11: #{tpu_custom_call.1} parent=1 // pred_check_branch
      %28 = sbr.rel (0) target = $region13
    $region12: #{tpu_custom_call.1} parent=1 // pred_region
      _
    $region13: #{tpu_custom_call.1} parent=1 // pred_fallthru
      _
    // Predicated region
    $region14: #{tpu_custom_call.1} parent=1 // pred_check
      _
    $region15: #{tpu_custom_call.1} parent=1 // pred_check_branch
      %30 = sbr.rel (0) target = $region17
    $region16: #{tpu_custom_call.1} parent=1 // pred_region
      _
    $region17: #{tpu_custom_call.1} parent=1 // pred_fallthru
      _
    // Predicated region
    $region18: #{tpu_custom_call.1} parent=1 // pred_check
      _
    $region19: #{tpu_custom_call.1} parent=1 // pred_check_branch
      %32 = sbr.rel (0) target = $region21
    $region20: #{tpu_custom_call.1} parent=1 // pred_region
      _
    $region21: #{tpu_custom_call.1} parent=1 // pred_fallthru
      _
    // Predicated region
    $region22: #{tpu_custom_call.1} parent=1 // pred_check
      _
    $region23: #{tpu_custom_call.1} parent=1 // pred_check_branch
      %34 = sbr.rel (0) target = $region25
    $region24: #{tpu_custom_call.1} parent=1 // pred_region
      _
    $region25: #{tpu_custom_call.1} parent=1 // pred_fallthru
      _
    // Predicated region
    $region26: #{tpu_custom_call.1} parent=1 // pred_check
      _
    $region27: #{tpu_custom_call.1} parent=1 // pred_check_branch
      %36 = sbr.rel (0) target = $region29
    $region28: #{tpu_custom_call.1} parent=1 // pred_region
      _
    $region29: #{tpu_custom_call.1} parent=1 // pred_fallthru
      _
    // Predicated region
    $region30: #{tpu_custom_call.1} parent=1 // pred_check
      _
    $region31: #{tpu_custom_call.1} parent=1 // pred_check_branch
      %38 = sbr.rel (0) target = $region33
    $region32: #{tpu_custom_call.1} parent=1 // pred_region
      _
    $region33: #{tpu_custom_call.1} parent=1 // pred_fallthru
      _
    // Predicated region
    $region34: #{tpu_custom_call.1} parent=1 // pred_check
      _
    $region35: #{tpu_custom_call.1} parent=1 // pred_check_branch
      %40 = sbr.rel (0) target = $region37
    $region36: #{tpu_custom_call.1} parent=1 // pred_region
      _
    $region37: #{tpu_custom_call.1} parent=1 // pred_fallthru
      _
    // Predicated region
    $region38: #{tpu_custom_call.1} parent=1 // pred_check
      _
    $region39: #{tpu_custom_call.1} parent=1 // pred_check_branch
      %42 = sbr.rel (0) target = $region41
    $region40: #{tpu_custom_call.1} parent=1 // pred_region
      _
    $region41: #{tpu_custom_call.1} parent=1 // pred_fallthru
      _
    // Predicated region
    $region42: #{tpu_custom_call.1} parent=1 // pred_check
      _
    $region43: #{tpu_custom_call.1} parent=1 // pred_check_branch
      %44 = sbr.rel (0) target = $region45
    $region44: #{tpu_custom_call.1} parent=1 // pred_region
      _
    $region45: #{tpu_custom_call.1} parent=1 // pred_fallthru
      _
    // Predicated region
    $region46: #{tpu_custom_call.1} parent=1 // pred_check
      _
    $region47: #{tpu_custom_call.1} parent=1 // pred_check_branch
      %46 = sbr.rel (0) target = $region49
    $region48: #{tpu_custom_call.1} parent=1 // pred_region
      _
    $region49: #{tpu_custom_call.1} parent=1 // pred_fallthru
      _
    // Predicated region
    $region50: #{tpu_custom_call.1} parent=1 // pred_check
      _
    $region51: #{tpu_custom_call.1} parent=1 // pred_check_branch
      %48 = sbr.rel (0) target = $region53
    $region52: #{tpu_custom_call.1} parent=1 // pred_region
      _
    $region53: #{tpu_custom_call.1} parent=1 // pred_fallthru
      _
    // Predicated region
    $region54: #{tpu_custom_call.1} parent=1 // pred_check
      _
    $region55: #{tpu_custom_call.1} parent=1 // pred_check_branch
      %50 = sbr.rel (0) target = $region57
    $region56: #{tpu_custom_call.1} parent=1 // pred_region
      _
    $region57: #{tpu_custom_call.1} parent=1 // pred_fallthru
      _
    // Predicated region
    $region58: #{tpu_custom_call.1} parent=1 // pred_check
      _
    $region59: #{tpu_custom_call.1} parent=1 // pred_check_branch
      %52 = sbr.rel (0) target = $region61
    $region60: #{tpu_custom_call.1} parent=1 // pred_region
      _
    $region61: #{tpu_custom_call.1} parent=1 // pred_fallthru
      _
    // Predicated region
    $region62: #{tpu_custom_call.1} parent=1 // pred_check
      _
    $region63: #{tpu_custom_call.1} parent=1 // pred_check_branch
      %54 = sbr.rel (0) target = $region65
    $region64: #{tpu_custom_call.1} parent=1 // pred_region
      _
    $region65: #{tpu_custom_call.1} parent=1 // pred_fallthru
      _
    // Predicated region
    $region66: #{tpu_custom_call.1} parent=1 // pred_check
      _
    $region67: #{tpu_custom_call.1} parent=1 // pred_check_branch
      %56 = sbr.rel (0) target = $region69
    $region68: #{tpu_custom_call.1} parent=1 // pred_region
      _
    $region69: #{tpu_custom_call.1} parent=1 // pred_fallthru
      _
    %v57 = vld [vmem:[%s0] sm:$0xff]
    %v58 = vld [vmem:[%s0 + $0x8] sm:$0xff]
    %v59 = vld [vmem:[%s1] sm:$0xff]
    %61 = vset.pattern.permute.xlu0 0
    %62 = vperm.xlu0 %61, %v59
    %v63 = vpop.permute.xlu0 %62
    %v65 = vmul.f32 %v57, %v63
    %v66 = vmul.f32 %v58, %v63
    %v67 = vld [vmem:[%s2] sm:$0xff]
    %69 = vset.pattern.permute.xlu0 0
    %70 = vperm.xlu0 %69, %v67
    %v71 = vpop.permute.xlu0 %70
    %v73 = vadd.f32 %v65, %v71
    %v74 = vadd.f32 %v66, %v71
    %v75 = vmul.f32 %v73, 0.01
    %v76 = vmul.f32 %v74, 0.01
    %v77 = vmax.f32 %v73, %v75
    %v78 = vmax.f32 %v74, %v76
    %79 = vrot.lane.b32.xlu0 %v77, 1
    %v80 = vpop.permute.xlu0 %79
    %81 = vrot.lane.b32.xlu0 %v78, 1
    %v82 = vpop.permute.xlu0 %81
    %v83 = vlaneseq
    %v84 = vand.u32 %v83, 127
    %vm85 = vcmp.lt.s32.totalorder %v84, 1
    %v86 = vsel %vm85, %v80, %v82
    %v87 = vsel %vm85, %v82, %v80
    %v88 = vld [vmem:[%s5] sm:$0x3]
    %v90 = vlaneseq
    %v91 = vshrl.u32 %v90, 7
    %v92 = vsub.s32 0, %v91
    %v93 = vrot.slane %v88, %v92
    %v94 = vlaneseq
    %v95 = vshrl.u32 %v94, 7
    %v96 = vsub.s32 1, %v95
    %v97 = vrot.slane %v88, %v96
    %v100 = vmul.f32 %v87, %v93
    %v101 = vmul.f32 %v86, %v97
    %102 = vrot.lane.b32.xlu0 %v77, 127
    %v103 = vpop.permute.xlu0 %102
    %104 = vrot.lane.b32.xlu0 %v78, 127
    %v105 = vpop.permute.xlu0 %104
    %vm106 = vcmp.lt.s32.totalorder %v84, 127
    %v107 = vsel %vm106, %v103, %v105
    %v108 = vsel %vm106, %v105, %v103
    %v109 = vld [vmem:[%s6] sm:$0x3]
    %v111 = vlaneseq
    %v112 = vshrl.u32 %v111, 7
    %v113 = vsub.s32 0, %v112
    %v114 = vrot.slane %v109, %v113
    %v115 = vlaneseq
    %v116 = vshrl.u32 %v115, 7
    %v117 = vsub.s32 1, %v116
    %v118 = vrot.slane %v109, %v117
    %v121 = vmul.f32 %v107, %v114
    %v122 = vmul.f32 %v108, %v118
    %v123 = vld [vmem:[%s3] sm:$0xff]
    %v124 = vld [vmem:[%s3 + $0x8] sm:$0xff]
    %v125 = vld [vmem:[%s4] sm:$0xff]
    %v126 = vld [vmem:[%s4 + $0x8] sm:$0xff]
    %128 = vset.pattern.permute.xlu0 0
    %129 = vperm.xlu0 %128, %v125
    %v130 = vpop.permute.xlu0 %129
    %133 = vset.pattern.permute.xlu0 0
    %134 = vperm.xlu0 %133, %v126
    %v135 = vpop.permute.xlu0 %134
    %vm137 = vcmask 195584
    %v139 = vsel %vm137, %v123, 0
    %v142 = vsel %vm137, %v124, 0
    %144 = vmatprep.subr.mxu0 %v101
    %145 = vmatpush1.msra.mxu0 %v100
    %146 = vmatprep.subr.mxu0 %v78
    %147 = vmatpush1.msra.mxu0 %v77
    %148 = vmatprep.subr.mxu0 %v122
    %149 = vmatpush1.msra.mxu0 %v121
    %150 = vmatprep.subr.mxu0 0.0
    %151 = vmatpush1.msra.mxu0 0.0
    %152 = vmatprep.subr.mxu0 0.0
    %153 = vmatpush1.msra.mxu0 0.0
    %154 = vmatprep.subr.mxu0 0.0
    %155 = vmatpush1.msra.mxu0 0.0
    %156 = vmatprep.subr.mxu0 0.0
    %157 = vmatpush1.msra.mxu0 0.0
    %158 = vmatprep.subr.mxu0 0.0
    %159 = vmatpush1.msra.mxu0 0.0
    %160 = vmatprep.subr.mxu0 0.0
    %161 = vmatpush1.msra.mxu0 0.0
    %162 = vmatprep.subr.mxu0 0.0
    %163 = vmatpush1.msra.mxu0 0.0
    %164 = vmatprep.subr.mxu0 0.0
    %165 = vmatpush1.msra.mxu0 0.0
    %166 = vmatprep.subr.mxu0 0.0
    %167 = vmatpush1.msra.mxu0 0.0
    %168 = vmatprep.subr.mxu0 0.0
    %169 = vmatpush1.msra.mxu0 0.0
    %170 = vmatprep.subr.mxu0 0.0
    %171 = vmatpush1.msra.mxu0 0.0
    %172 = vmatprep.subr.mxu0 0.0
    %173 = vmatpush1.msra.mxu0 0.0
    %174 = vmatprep.subr.mxu0 0.0
    %175 = vmatpush1.msra.mxu0 0.0
    %176 = vmatprep.subr.mxu0 0.0
    %177 = vmatpush1.msra.mxu0 0.0
    %178 = vmatprep.subr.mxu0 0.0
    %179 = vmatpush1.msra.mxu0 0.0
    %180 = vmatprep.subr.mxu0 0.0
    %181 = vmatpush1.msra.mxu0 0.0
    %182 = vmatprep.subr.mxu0 0.0
    %183 = vmatpush1.msra.mxu0 0.0
    %184 = vmatprep.subr.mxu0 0.0
    %185 = vmatpush1.msra.mxu0 0.0
    %186 = vmatprep.subr.mxu0 0.0
    %187 = vmatpush1.msra.mxu0 0.0
    %188 = vmatprep.subr.mxu0 0.0
    %189 = vmatpush1.msra.mxu0 0.0
    %190 = vmatprep.subr.mxu0 0.0
    %191 = vmatpush1.msra.mxu0 0.0
    %192 = vmatprep.subr.mxu0 0.0
    %193 = vmatpush1.msra.mxu0 0.0
    %194 = vmatprep.subr.mxu0 0.0
    %195 = vmatpush1.msra.mxu0 0.0
    %196 = vmatprep.subr.mxu0 0.0
    %197 = vmatpush1.msra.mxu0 0.0
    %198 = vmatprep.subr.mxu0 0.0
    %199 = vmatpush1.msra.mxu0 0.0
    %200 = vmatprep.subr.mxu0 0.0
    %201 = vmatpush1.msra.mxu0 0.0
    %202 = vmatprep.subr.mxu0 0.0
    %203 = vmatpush1.msra.mxu0 0.0
    %204 = vmatprep.subr.mxu0 0.0
    %205 = vmatpush1.msra.mxu0 0.0
    %206 = vmatprep.subr.mxu0 0.0
    %207 = vmatpush1.msra.mxu0 0.0
    %208 = vmatprep.mubr.f32.mxu0 0.0
    %209 = vmatmul.mubr.f32.gmra.mrb[0].mxu0 %v139
    %v210 = vpop.f32.mrb[0].mxu0
    %v211 = vadd.f32 %v130, %v210
    %v212 = vpop.f32.mrb[0].mxu0
    %v213 = vadd.f32 %v130, %v212
    %214 = vmatprep.mubr.f32.mxu0 0.0
    %215 = vmatmul.mubr.f32.gmra.mrb[0].mxu0 %v142
    %v216 = vpop.f32.mrb[0].mxu0
    %v217 = vadd.f32 %v135, %v216
    %v218 = vpop.f32.mrb[0].mxu0
    %v219 = vadd.f32 %v135, %v218
    %220 = vdwg.mxu0
    %v221 = vld [vmem:[%s7] sm:$0xff]
    %v222 = vld [vmem:[%s7 + $0x8] sm:$0xff]
    %v223 = vld [vmem:[%s8] sm:$0xff]
    %v224 = vld [vmem:[%s8 + $0x8] sm:$0xff]
    %226 = vset.pattern.permute.xlu0 0
    %227 = vperm.xlu0 %226, %v223
    %v228 = vpop.permute.xlu0 %227
    %231 = vset.pattern.permute.xlu0 0
    %232 = vperm.xlu0 %231, %v224
    %v233 = vpop.permute.xlu0 %232
    %vm235 = vcmask 64512
    %v237 = vsel %vm235, %v221, 0
    %v240 = vsel %vm235, %v222, 0
    %242 = vmatprep.subr.mxu0 %v58
    %243 = vmatpush1.msra.mxu0 %v57
    %244 = vmatprep.subr.mxu0 0.0
    %245 = vmatpush1.msra.mxu0 0.0
    %246 = vmatprep.subr.mxu0 0.0
    %247 = vmatpush1.msra.mxu0 0.0
    %248 = vmatprep.subr.mxu0 0.0
    %249 = vmatpush1.msra.mxu0 0.0
    %250 = vmatprep.subr.mxu0 0.0
    %251 = vmatpush1.msra.mxu0 0.0
    %252 = vmatprep.subr.mxu0 0.0
    %253 = vmatpush1.msra.mxu0 0.0
    %254 = vmatprep.subr.mxu0 0.0
    %255 = vmatpush1.msra.mxu0 0.0
    %256 = vmatprep.subr.mxu0 0.0
    %257 = vmatpush1.msra.mxu0 0.0
    %258 = vmatprep.subr.mxu0 0.0
    %259 = vmatpush1.msra.mxu0 0.0
    %260 = vmatprep.subr.mxu0 0.0
    %261 = vmatpush1.msra.mxu0 0.0
    %262 = vmatprep.subr.mxu0 0.0
    %263 = vmatpush1.msra.mxu0 0.0
    %264 = vmatprep.subr.mxu0 0.0
    %265 = vmatpush1.msra.mxu0 0.0
    %266 = vmatprep.subr.mxu0 0.0
    %267 = vmatpush1.msra.mxu0 0.0
    %268 = vmatprep.subr.mxu0 0.0
    %269 = vmatpush1.msra.mxu0 0.0
    %270 = vmatprep.subr.mxu0 0.0
    %271 = vmatpush1.msra.mxu0 0.0
    %272 = vmatprep.subr.mxu0 0.0
    %273 = vmatpush1.msra.mxu0 0.0
    %274 = vmatprep.subr.mxu0 0.0
    %275 = vmatpush1.msra.mxu0 0.0
    %276 = vmatprep.subr.mxu0 0.0
    %277 = vmatpush1.msra.mxu0 0.0
    %278 = vmatprep.subr.mxu0 0.0
    %279 = vmatpush1.msra.mxu0 0.0
    %280 = vmatprep.subr.mxu0 0.0
    %281 = vmatpush1.msra.mxu0 0.0
    %282 = vmatprep.subr.mxu0 0.0
    %283 = vmatpush1.msra.mxu0 0.0
    %284 = vmatprep.subr.mxu0 0.0
    %285 = vmatpush1.msra.mxu0 0.0
    %286 = vmatprep.subr.mxu0 0.0
    %287 = vmatpush1.msra.mxu0 0.0
    %288 = vmatprep.subr.mxu0 0.0
    %289 = vmatpush1.msra.mxu0 0.0
    %290 = vmatprep.subr.mxu0 0.0
    %291 = vmatpush1.msra.mxu0 0.0
    %292 = vmatprep.subr.mxu0 0.0
    %293 = vmatpush1.msra.mxu0 0.0
    %294 = vmatprep.subr.mxu0 0.0
    %295 = vmatpush1.msra.mxu0 0.0
    %296 = vmatprep.subr.mxu0 0.0
    %297 = vmatpush1.msra.mxu0 0.0
    %298 = vmatprep.subr.mxu0 0.0
    %299 = vmatpush1.msra.mxu0 0.0
    %300 = vmatprep.subr.mxu0 0.0
    %301 = vmatpush1.msra.mxu0 0.0
    %302 = vmatprep.subr.mxu0 0.0
    %303 = vmatpush1.msra.mxu0 0.0
    %304 = vmatprep.subr.mxu0 0.0
    %305 = vmatpush1.msra.mxu0 0.0
    %306 = vmatprep.mubr.f32.mxu0 0.0
    %307 = vmatmul.mubr.f32.gmra.mrb[0].mxu0 %v237
    %v308 = vpop.f32.mrb[0].mxu0
    %v309 = vadd.f32 %v228, %v308
    %v310 = vpop.f32.mrb[0].mxu0
    %v311 = vadd.f32 %v228, %v310
    %312 = vmatprep.mubr.f32.mxu0 0.0
    %313 = vmatmul.mubr.f32.gmra.mrb[0].mxu0 %v240
    %v314 = vpop.f32.mrb[0].mxu0
    %v315 = vadd.f32 %v233, %v314
    %v316 = vpop.f32.mrb[0].mxu0
    %v317 = vadd.f32 %v233, %v316
    %318 = vdwg.mxu0
    %v319 = vadd.f32 %v211, %v309
    %v320 = vadd.f32 %v213, %v311
    %v321 = vadd.f32 %v217, %v315
    %v322 = vadd.f32 %v219, %v317
    %v323 = vld [vmem:[%s9] sm:$0xff]
    %v324 = vld [vmem:[%s9 + $0x8] sm:$0xff]
    %326 = vset.pattern.permute.xlu0 0
    %327 = vperm.xlu0 %326, %v323
    %v328 = vpop.permute.xlu0 %327
    %331 = vset.pattern.permute.xlu0 0
    %332 = vperm.xlu0 %331, %v324
    %v333 = vpop.permute.xlu0 %332
    %v335 = vmul.f32 %v319, %v328
    %v336 = vmul.f32 %v320, %v328
    %v337 = vmul.f32 %v321, %v333
    %v338 = vmul.f32 %v322, %v333
    %v339 = vld [vmem:[%s10] sm:$0xff]
    %v340 = vld [vmem:[%s10 + $0x8] sm:$0xff]
    %342 = vset.pattern.permute.xlu0 0
    %343 = vperm.xlu0 %342, %v339
    %v344 = vpop.permute.xlu0 %343
    %347 = vset.pattern.permute.xlu0 0
    %348 = vperm.xlu0 %347, %v340
    %v349 = vpop.permute.xlu0 %348
    %v351 = vadd.f32 %v335, %v344
    %v352 = vadd.f32 %v336, %v344
    %v353 = vadd.f32 %v337, %v349
    %v354 = vadd.f32 %v338, %v349
    %v355 = vmul.f32 %v351, 0.01
    %v356 = vmul.f32 %v352, 0.01
    %v357 = vmul.f32 %v353, 0.01
    %v358 = vmul.f32 %v354, 0.01
    %v359 = vmax.f32 %v351, %v355
    %v360 = vmax.f32 %v352, %v356
    %v361 = vmax.f32 %v353, %v357
    %v362 = vmax.f32 %v354, %v358
    %363 = vrot.lane.b32.xlu0 %v359, 2
    %v364 = vpop.permute.xlu0 %363
    %365 = vrot.lane.b32.xlu0 %v361, 2
    %v366 = vpop.permute.xlu0 %365
    %367 = vrot.lane.b32.xlu0 %v360, 2
    %v368 = vpop.permute.xlu0 %367
    %369 = vrot.lane.b32.xlu0 %v362, 2
    %v370 = vpop.permute.xlu0 %369
    %vm371 = vcmp.lt.s32.totalorder %v84, 2
    %v372 = vsel %vm371, %v364, %v368
    %v373 = vsel %vm371, %v366, %v370
    %v374 = vsel %vm371, %v368, %v364
    %v375 = vsel %vm371, %v370, %v366
    %v376 = vld [vmem:[%s13] sm:$0x3]
    %v378 = vlaneseq
    %v379 = vshrl.u32 %v378, 7
    %v380 = vsub.s32 0, %v379
    %v381 = vrot.slane %v376, %v380
    %v382 = vlaneseq
    %v383 = vshrl.u32 %v382, 7
    %v384 = vsub.s32 1, %v383
    %v385 = vrot.slane %v376, %v384
    %v388 = vmul.f32 %v374, %v381
    %v389 = vmul.f32 %v372, %v385
    %v390 = vmul.f32 %v375, %v381
    %v391 = vmul.f32 %v373, %v385
    %392 = vrot.lane.b32.xlu0 %v359, 126
    %v393 = vpop.permute.xlu0 %392
    %394 = vrot.lane.b32.xlu0 %v361, 126
    %v395 = vpop.permute.xlu0 %394
    %396 = vrot.lane.b32.xlu0 %v360, 126
    %v397 = vpop.permute.xlu0 %396
    %398 = vrot.lane.b32.xlu0 %v362, 126
    %v399 = vpop.permute.xlu0 %398
    %vm400 = vcmp.lt.s32.totalorder %v84, 126
    %v401 = vsel %vm400, %v393, %v397
    %v402 = vsel %vm400, %v395, %v399
    %v403 = vsel %vm400, %v397, %v393
    %v404 = vsel %vm400, %v399, %v395
    %v405 = vld [vmem:[%s14] sm:$0x3]
    %v407 = vlaneseq
    %v408 = vshrl.u32 %v407, 7
    %v409 = vsub.s32 0, %v408
    %v410 = vrot.slane %v405, %v409
    %v411 = vlaneseq
    %v412 = vshrl.u32 %v411, 7
    %v413 = vsub.s32 1, %v412
    %v414 = vrot.slane %v405, %v413
    %v417 = vmul.f32 %v401, %v410
    %v418 = vmul.f32 %v403, %v414
    %v419 = vmul.f32 %v402, %v410
    %v420 = vmul.f32 %v404, %v414
    %v421 = vld [vmem:[%s11] sm:$0xff]
    %v422 = vld [vmem:[%s12] sm:$0xff]
    %424 = vset.pattern.permute.xlu0 0
    %425 = vperm.xlu0 %424, %v422
    %v426 = vpop.permute.xlu0 %425
    %vm428 = vcmask 392192
    %v430 = vsel %vm428, %v421, 0
    %432 = vmatprep.subr.mxu0 %v389
    %433 = vmatpush1.msra.mxu0 %v388
    %434 = vmatprep.subr.mxu0 %v391
    %435 = vmatpush1.msra.mxu0 %v390
    %436 = vmatprep.subr.mxu0 %v360
    %437 = vmatpush1.msra.mxu0 %v359
    %438 = vmatprep.subr.mxu0 %v362
    %439 = vmatpush1.msra.mxu0 %v361
    %440 = vmatprep.subr.mxu0 %v418
    %441 = vmatpush1.msra.mxu0 %v417
    %442 = vmatprep.subr.mxu0 %v420
    %443 = vmatpush1.msra.mxu0 %v419
    %444 = vmatprep.subr.mxu0 0.0
    %445 = vmatpush1.msra.mxu0 0.0
    %446 = vmatprep.subr.mxu0 0.0
    %447 = vmatpush1.msra.mxu0 0.0
    %448 = vmatprep.subr.mxu0 0.0
    %449 = vmatpush1.msra.mxu0 0.0
    %450 = vmatprep.subr.mxu0 0.0
    %451 = vmatpush1.msra.mxu0 0.0
    %452 = vmatprep.subr.mxu0 0.0
    %453 = vmatpush1.msra.mxu0 0.0
    %454 = vmatprep.subr.mxu0 0.0
    %455 = vmatpush1.msra.mxu0 0.0
    %456 = vmatprep.subr.mxu0 0.0
    %457 = vmatpush1.msra.mxu0 0.0
    %458 = vmatprep.subr.mxu0 0.0
    %459 = vmatpush1.msra.mxu0 0.0
    %460 = vmatprep.subr.mxu0 0.0
    %461 = vmatpush1.msra.mxu0 0.0
    %462 = vmatprep.subr.mxu0 0.0
    %463 = vmatpush1.msra.mxu0 0.0
    %464 = vmatprep.subr.mxu0 0.0
    %465 = vmatpush1.msra.mxu0 0.0
    %466 = vmatprep.subr.mxu0 0.0
    %467 = vmatpush1.msra.mxu0 0.0
    %468 = vmatprep.subr.mxu0 0.0
    %469 = vmatpush1.msra.mxu0 0.0
    %470 = vmatprep.subr.mxu0 0.0
    %471 = vmatpush1.msra.mxu0 0.0
    %472 = vmatprep.subr.mxu0 0.0
    %473 = vmatpush1.msra.mxu0 0.0
    %474 = vmatprep.subr.mxu0 0.0
    %475 = vmatpush1.msra.mxu0 0.0
    %476 = vmatprep.subr.mxu0 0.0
    %477 = vmatpush1.msra.mxu0 0.0
    %478 = vmatprep.subr.mxu0 0.0
    %479 = vmatpush1.msra.mxu0 0.0
    %480 = vmatprep.subr.mxu0 0.0
    %481 = vmatpush1.msra.mxu0 0.0
    %482 = vmatprep.subr.mxu0 0.0
    %483 = vmatpush1.msra.mxu0 0.0
    %484 = vmatprep.subr.mxu0 0.0
    %485 = vmatpush1.msra.mxu0 0.0
    %486 = vmatprep.subr.mxu0 0.0
    %487 = vmatpush1.msra.mxu0 0.0
    %488 = vmatprep.subr.mxu0 0.0
    %489 = vmatpush1.msra.mxu0 0.0
    %490 = vmatprep.subr.mxu0 0.0
    %491 = vmatpush1.msra.mxu0 0.0
    %492 = vmatprep.subr.mxu0 0.0
    %493 = vmatpush1.msra.mxu0 0.0
    %494 = vmatprep.subr.mxu0 0.0
    %495 = vmatpush1.msra.mxu0 0.0
    %496 = vmatprep.mubr.f32.mxu0 0.0
    %497 = vmatmul.mubr.f32.gmra.mrb[0].mxu0 %v430
    %v498 = vpop.f32.mrb[0].mxu0
    %v499 = vadd.f32 %v426, %v498
    %v500 = vpop.f32.mrb[0].mxu0
    %v501 = vadd.f32 %v426, %v500
    %502 = vdwg.mxu0
    %v503 = vld [vmem:[%s15] sm:$0xff]
    %v504 = vld [vmem:[%s16] sm:$0xff]
    %506 = vset.pattern.permute.xlu0 0
    %507 = vperm.xlu0 %506, %v504
    %v508 = vpop.permute.xlu0 %507
    %vm510 = vcmask 130048
    %v512 = vsel %vm510, %v503, 0
    %514 = vmatprep.subr.mxu0 %v320
    %515 = vmatpush1.msra.mxu0 %v319
    %516 = vmatprep.subr.mxu0 %v322
    %517 = vmatpush1.msra.mxu0 %v321
    %518 = vmatprep.subr.mxu0 0.0
    %519 = vmatpush1.msra.mxu0 0.0
    %520 = vmatprep.subr.mxu0 0.0
    %521 = vmatpush1.msra.mxu0 0.0
    %522 = vmatprep.subr.mxu0 0.0
    %523 = vmatpush1.msra.mxu0 0.0
    %524 = vmatprep.subr.mxu0 0.0
    %525 = vmatpush1.msra.mxu0 0.0
    %526 = vmatprep.subr.mxu0 0.0
    %527 = vmatpush1.msra.mxu0 0.0
    %528 = vmatprep.subr.mxu0 0.0
    %529 = vmatpush1.msra.mxu0 0.0
    %530 = vmatprep.subr.mxu0 0.0
    %531 = vmatpush1.msra.mxu0 0.0
    %532 = vmatprep.subr.mxu0 0.0
    %533 = vmatpush1.msra.mxu0 0.0
    %534 = vmatprep.subr.mxu0 0.0
    %535 = vmatpush1.msra.mxu0 0.0
    %536 = vmatprep.subr.mxu0 0.0
    %537 = vmatpush1.msra.mxu0 0.0
    %538 = vmatprep.subr.mxu0 0.0
    %539 = vmatpush1.msra.mxu0 0.0
    %540 = vmatprep.subr.mxu0 0.0
    %541 = vmatpush1.msra.mxu0 0.0
    %542 = vmatprep.subr.mxu0 0.0
    %543 = vmatpush1.msra.mxu0 0.0
    %544 = vmatprep.subr.mxu0 0.0
    %545 = vmatpush1.msra.mxu0 0.0
    %546 = vmatprep.subr.mxu0 0.0
    %547 = vmatpush1.msra.mxu0 0.0
    %548 = vmatprep.subr.mxu0 0.0
    %549 = vmatpush1.msra.mxu0 0.0
    %550 = vmatprep.subr.mxu0 0.0
    %551 = vmatpush1.msra.mxu0 0.0
    %552 = vmatprep.subr.mxu0 0.0
    %553 = vmatpush1.msra.mxu0 0.0
    %554 = vmatprep.subr.mxu0 0.0
    %555 = vmatpush1.msra.mxu0 0.0
    %556 = vmatprep.subr.mxu0 0.0
    %557 = vmatpush1.msra.mxu0 0.0
    %558 = vmatprep.subr.mxu0 0.0
    %559 = vmatpush1.msra.mxu0 0.0
    %560 = vmatprep.subr.mxu0 0.0
    %561 = vmatpush1.msra.mxu0 0.0
    %562 = vmatprep.subr.mxu0 0.0
    %563 = vmatpush1.msra.mxu0 0.0
    %564 = vmatprep.subr.mxu0 0.0
    %565 = vmatpush1.msra.mxu0 0.0
    %566 = vmatprep.subr.mxu0 0.0
    %567 = vmatpush1.msra.mxu0 0.0
    %568 = vmatprep.subr.mxu0 0.0
    %569 = vmatpush1.msra.mxu0 0.0
    %570 = vmatprep.subr.mxu0 0.0
    %571 = vmatpush1.msra.mxu0 0.0
    %572 = vmatprep.subr.mxu0 0.0
    %573 = vmatpush1.msra.mxu0 0.0
    %574 = vmatprep.subr.mxu0 0.0
    %575 = vmatpush1.msra.mxu0 0.0
    %576 = vmatprep.subr.mxu0 0.0
    %577 = vmatpush1.msra.mxu0 0.0
    %578 = vmatprep.mubr.f32.mxu0 0.0
    %579 = vmatmul.mubr.f32.gmra.mrb[0].mxu0 %v512
    %v580 = vpop.f32.mrb[0].mxu0
    %v581 = vadd.f32 %v508, %v580
    %v582 = vpop.f32.mrb[0].mxu0
    %v583 = vadd.f32 %v508, %v582
    %584 = vdwg.mxu0
    %v585 = vadd.f32 %v499, %v581
    %v586 = vadd.f32 %v501, %v583
    %v587 = vadd.f32 %v585, %v57
    %v588 = vadd.f32 %v586, %v58
    %589 = vst [vmem:[#allocation2] sm:$0xff] %v587
    %590 = vst [vmem:[#allocation2 + $0x8] sm:$0xff] %v588
    // Predicated region
    $region70: #{tpu_custom_call.1} parent=1 // pred_check
      _
    $region71: #{tpu_custom_call.1} parent=1 // pred_check_branch
      %592 = sbr.rel (0) target = $region73
    $region72: #{tpu_custom_call.1} parent=1 // pred_region
      %s594 = ssub.s32 256, 256
      %595 = vsyncadd [#allocation3], %s594
      %s597 = sshll.u32 [#allocation2], 4
      %s598 = int_to_ptr.vmem [resolvable:$true] %s597
      %600 = dma.vmem_to_hbm [thread:$0]  %s598, 256, %s17, [#allocation3]
    $region73: #{tpu_custom_call.1} parent=1 // pred_fallthru
      _
    // Predicated region
    $region74: #{tpu_custom_call.1} parent=1 // pred_check
      _
    $region75: #{tpu_custom_call.1} parent=1 // pred_check_branch
      %602 = sbr.rel (0) target = $region77
    $region76: #{tpu_custom_call.1} parent=1 // pred_region
      %603 = dma.done [#allocation3], 256
    $region77: #{tpu_custom_call.1} parent=1 // pred_fallthru
      _
    %604 = vsyncpa [#allocation3], 1

</llo_original>
